<compile_context>
chip_gen: v7x
topology: tpu7x:2x2x1
jax: 0.10.0
libtpu: 0.0.40
codegen_flags: <defaults>
</compile_context>

<pallas_src>
import functools

import jax
import jax.numpy as jnp
from jax.experimental import pallas as pl
from jax.experimental.pallas import tpu as pltpu

LANE = 128  # TPU vreg lane width


def _round_up(n, m):
    return (n + m - 1) // m * m


def _scoped_vmem_cap():
    """32 MiB on v7x (64 MiB physical VMEM), 64 MiB on v5e/v6e (128 MiB physical)."""
    try:
        phys = pltpu.get_tpu_info().vmem_capacity_bytes
    except Exception:
        phys = 64 << 20                      # unknown -> assume v7x (conservative)
    return (32 << 20) if phys <= (64 << 20) else (64 << 20)


# ----------------------------------------------------------------------------
# Kernel
# ----------------------------------------------------------------------------
def mlp_kernel(x_ref, w_ref, b_ref, o_ref, *, n_layers):
    """x_ref: (TB, D_pad) bf16; w_ref: (L, D_pad, D_pad) bf16; b_ref: (L, 1, D_pad) f32."""
    h = x_ref[...]                                               # (TB, D_pad) bf16
    for k in range(n_layers):                                    # statically unrolled
        acc = jnp.dot(h, w_ref[k], preferred_element_type=jnp.float32) + b_ref[k]
        if k < n_layers - 1:
            acc = jnp.maximum(acc, 0.0)      # ReLU in f32 (VPU); eval-mode Dropout = identity
            h = acc.astype(jnp.bfloat16)     # back to bf16 for the next MXU contraction
        else:
            h = acc
    o_ref[...] = h.astype(o_ref.dtype)                           # lane-dense bf16 store


# ----------------------------------------------------------------------------
# One-time parameter packing (outside the per-call path)
# ----------------------------------------------------------------------------
def pack_params(params):
    """Pack per-layer (in,out) weights / (1,out) biases into two pre-padded slabs.

    Returns (w_slab bf16 (L, D_pad, D_pad), b_slab f32 (L, 1, D_pad), layer_dims).
    Call once after init; the padded slabs are reused by every mlp_forward call.
    """
    n_layers = 0
    while f"w{n_layers + 1}" in params:
        n_layers += 1
    dims = (params["w1"].shape[0],) + tuple(
        params[f"w{i}"].shape[1] for i in range(1, n_layers + 1))
    d_pad = _round_up(max(dims), LANE)

    w_slab = jnp.zeros((n_layers, d_pad, d_pad), jnp.bfloat16)
    b_slab = jnp.zeros((n_layers, 1, d_pad), jnp.float32)
    for k in range(n_layers):
        w = params[f"w{k + 1}"].astype(jnp.bfloat16)
        b = params[f"b{k + 1}"].reshape(1, -1).astype(jnp.float32)
        w_slab = w_slab.at[k, :w.shape[0], :w.shape[1]].set(w)
        b_slab = b_slab.at[k, :, :b.shape[1]].set(b)
    return w_slab, b_slab, dims


# ----------------------------------------------------------------------------
# Forward
# ----------------------------------------------------------------------------
@functools.partial(jax.jit, static_argnames=("layer_dims", "max_tb"))
def mlp_forward(x, w_slab, b_slab, *, layer_dims, max_tb=4096):
    """x: (B, input_dim). w_slab/b_slab from pack_params(). Returns (B, output_dim) bf16."""
    n_layers, d_pad, _ = w_slab.shape
    in_dim, out_dim = layer_dims[0], layer_dims[-1]

    # --- batch tiling: >=2 grid steps for large B (v7x megacore), 16-row granule
    B = x.shape[0]
    TB = min(max_tb, _round_up(pl.cdiv(B, 2), 16))
    B_pad = _round_up(B, TB)
    grid = (B_pad // TB,)

    # --- per-call work is ONLY padding/casting x (params are pre-packed) -----
    x_pad = jnp.zeros((B_pad, d_pad), jnp.bfloat16).at[:B, :in_dim].set(
        x.astype(jnp.bfloat16))

    # --- VMEM budget: 2x-buffered bf16 in/out tiles + 1x-buffered params
    #     + in-kernel f32 activation temporaries, 1.5x headroom, gen-gated cap.
    tile_bf16 = TB * d_pad * 2
    act_f32_bytes = 3 * TB * d_pad * 4
    param_bytes = w_slab.size * 2 + b_slab.size * 4
    vmem_limit = int(1.5 * (2 * (tile_bf16 + tile_bf16) + param_bytes + act_f32_bytes))
    vmem_limit = int(min(max(vmem_limit, 4 << 20), _scoped_vmem_cap()))

    # Real (unpadded) FLOPs; bytes_accessed is the true padded traffic.
    flops = 2 * B_pad * sum(di * do for di, do in zip(layer_dims[:-1], layer_dims[1:]))
    cost = pl.CostEstimate(
        flops=flops,
        transcendentals=0,
        bytes_accessed=(x_pad.size * 2 + w_slab.size * 2 + b_slab.size * 4
                        + B_pad * d_pad * 2),
    )

    const3 = lambda i: (0, 0, 0)
    out_pad = pl.pallas_call(
        functools.partial(mlp_kernel, n_layers=n_layers),
        out_shape=jax.ShapeDtypeStruct((B_pad, d_pad), jnp.bfloat16),
        grid=grid,
        in_specs=[
            pl.BlockSpec((TB, d_pad), lambda i: (i, 0)),                 # x: batch-tiled
            pl.BlockSpec((n_layers, d_pad, d_pad), const3,               # weights: resident,
                         pipeline_mode=pl.Buffered(1)),                  #   single-buffered
            pl.BlockSpec((n_layers, 1, d_pad), const3,                   # biases: resident,
                         pipeline_mode=pl.Buffered(1)),                  #   single-buffered
        ],
        out_specs=pl.BlockSpec((TB, d_pad), lambda i: (i, 0)),
        compiler_params=pltpu.CompilerParams(
            dimension_semantics=("parallel",),   # shard batch tiles across v7x's 2 TCs
            vmem_limit_bytes=vmem_limit,
        ),
        cost_estimate=cost,
    )(x_pad, w_slab, b_slab)

    # TODO(synk): fuse this [:B, :out_dim] slice into the downstream consumer to
    # avoid the post-kernel strided copy (2 useful lanes of 128).
    return out_pad[:B, :out_dim]


# ----------------------------------------------------------------------------
# Reference / init (mirrors MLP._initialize_weights: kaiming fan_in/relu, zero bias)
# ----------------------------------------------------------------------------
def init_params(key, input_dim=20, hidden_dims=(64, 32), output_dim=2):
    dims = [input_dim, *hidden_dims, output_dim]
    params = {}
    keys = jax.random.split(key, len(dims) - 1)
    for i, (d_in, d_out) in enumerate(zip(dims[:-1], dims[1:]), start=1):
        std = (2.0 / d_in) ** 0.5
        params[f"w{i}"] = std * jax.random.normal(keys[i - 1], (d_in, d_out),
                                                  dtype=jnp.float32)
        params[f"b{i}"] = jnp.zeros((1, d_out), dtype=jnp.float32)
    return params


def mlp_reference(x, params):
    h = jnp.maximum(x @ params["w1"] + params["b1"], 0.0)
    h = jnp.maximum(h @ params["w2"] + params["b2"], 0.0)
    return h @ params["w3"] + params["b3"]


if __name__ == "__main__":
    key = jax.random.PRNGKey(0)
    pkey, xkey = jax.random.split(key)

    input_dim, hidden_dims, output_dim = 20, (64, 32), 2
    batch = 8

    params = init_params(pkey, input_dim, hidden_dims, output_dim)
    x = jax.random.normal(xkey, (batch, input_dim), dtype=jnp.float32)

    # Pack parameters ONCE (outside the per-call path).
    w_slab, b_slab, layer_dims = pack_params(params)
    w_slab, b_slab = jax.block_until_ready((w_slab, b_slab))

    out = mlp_forward(x, w_slab, b_slab, layer_dims=layer_dims)
    out = jax.block_until_ready(out)

    ref = mlp_reference(x, params)
    assert out.shape == (batch, output_dim), out.shape
    # bf16 matmul operands + bf16 output store -> relaxed tolerance vs f32 reference.
    assert jnp.allclose(out.astype(jnp.float32), ref, atol=5e-2, rtol=5e-2), \
        float(jnp.max(jnp.abs(out.astype(jnp.float32) - ref)))

    print("KERNEL_OK")
</pallas_src>

<mosaic_0001>
module attributes {stable_mosaic.version = 11 : i64} {
  func.func @mlp_kernel(%arg0: i32, %arg1: memref<16x128xbf16, #tpu.memory_space<vmem>>, %arg2: memref<3x128x128xbf16, #tpu.memory_space<vmem>>, %arg3: memref<3x1x128xf32, #tpu.memory_space<vmem>>, %arg4: memref<16x128xbf16, #tpu.memory_space<vmem>>) attributes {dimension_semantics = [#tpu.dimension_semantics<parallel>], iteration_bounds = array<i64: 1>, scalar_prefetch = 0 : i64, scratch_operands = 0 : i64, tpu.core_type = #tpu.core_type<tc>, window_params = [{transform_indices = @transform_0, window_bounds = array<i64: 16, 128>}, {pipeline_mode = #tpu.pipeline_mode<synchronous>, transform_indices = @transform_1, window_bounds = array<i64: 3, 128, 128>}, {pipeline_mode = #tpu.pipeline_mode<synchronous>, transform_indices = @transform_2, window_bounds = array<i64: 3, 1, 128>}, {transform_indices = @transform_3, window_bounds = array<i64: 16, 128>}]} {
    %c0 = arith.constant 0 : index
    %c0_0 = arith.constant 0 : index
    %0 = vector.load %arg1[%c0, %c0_0] : memref<16x128xbf16, #tpu.memory_space<vmem>>, vector<16x128xbf16>
    %c0_1 = arith.constant 0 : index
    %c0_2 = arith.constant 0 : index
    %c0_3 = arith.constant 0 : index
    %1 = vector.load %arg2[%c0_1, %c0_2, %c0_3] : memref<3x128x128xbf16, #tpu.memory_space<vmem>>, vector<1x128x128xbf16>
    %2 = vector.shape_cast %1 : vector<1x128x128xbf16> to vector<128x128xbf16>
    %cst = arith.constant dense<0.000000e+00> : vector<16x128xf32>
    %3 = tpu.matmul %0, %2, %cst {dimension_numbers = #tpu.dot_dimension_numbers<[1], [0], [0], [1], [0, 0, 1, 1], [], []>} : vector<16x128xbf16>, vector<128x128xbf16>, vector<16x128xf32> -> vector<16x128xf32>
    %c0_4 = arith.constant 0 : index
    %c0_5 = arith.constant 0 : index
    %c0_6 = arith.constant 0 : index
    %4 = vector.load %arg3[%c0_4, %c0_5, %c0_6] : memref<3x1x128xf32, #tpu.memory_space<vmem>>, vector<1x1x128xf32>
    %5 = vector.shape_cast %4 : vector<1x1x128xf32> to vector<1x128xf32>
    %6 = vector.broadcast %5 : vector<1x128xf32> to vector<16x128xf32>
    %7 = arith.addf %3, %6 : vector<16x128xf32>
    %cst_7 = arith.constant 0.000000e+00 : f32
    %8 = vector.broadcast %cst_7 : f32 to vector<16x128xf32>
    %9 = arith.maximumf %7, %8 : vector<16x128xf32>
    %10 = arith.truncf %9 : vector<16x128xf32> to vector<16x128xbf16>
    %c1 = arith.constant 1 : index
    %c0_8 = arith.constant 0 : index
    %c0_9 = arith.constant 0 : index
    %11 = vector.load %arg2[%c1, %c0_8, %c0_9] : memref<3x128x128xbf16, #tpu.memory_space<vmem>>, vector<1x128x128xbf16>
    %12 = vector.shape_cast %11 : vector<1x128x128xbf16> to vector<128x128xbf16>
    %cst_10 = arith.constant dense<0.000000e+00> : vector<16x128xf32>
    %13 = tpu.matmul %10, %12, %cst_10 {dimension_numbers = #tpu.dot_dimension_numbers<[1], [0], [0], [1], [0, 0, 1, 1], [], []>} : vector<16x128xbf16>, vector<128x128xbf16>, vector<16x128xf32> -> vector<16x128xf32>
    %c1_11 = arith.constant 1 : index
    %c0_12 = arith.constant 0 : index
    %c0_13 = arith.constant 0 : index
    %14 = vector.load %arg3[%c1_11, %c0_12, %c0_13] : memref<3x1x128xf32, #tpu.memory_space<vmem>>, vector<1x1x128xf32>
    %15 = vector.shape_cast %14 : vector<1x1x128xf32> to vector<1x128xf32>
    %16 = vector.broadcast %15 : vector<1x128xf32> to vector<16x128xf32>
    %17 = arith.addf %13, %16 : vector<16x128xf32>
    %cst_14 = arith.constant 0.000000e+00 : f32
    %18 = vector.broadcast %cst_14 : f32 to vector<16x128xf32>
    %19 = arith.maximumf %17, %18 : vector<16x128xf32>
    %20 = arith.truncf %19 : vector<16x128xf32> to vector<16x128xbf16>
    %c2 = arith.constant 2 : index
    %c0_15 = arith.constant 0 : index
    %c0_16 = arith.constant 0 : index
    %21 = vector.load %arg2[%c2, %c0_15, %c0_16] : memref<3x128x128xbf16, #tpu.memory_space<vmem>>, vector<1x128x128xbf16>
    %22 = vector.shape_cast %21 : vector<1x128x128xbf16> to vector<128x128xbf16>
    %cst_17 = arith.constant dense<0.000000e+00> : vector<16x128xf32>
    %23 = tpu.matmul %20, %22, %cst_17 {dimension_numbers = #tpu.dot_dimension_numbers<[1], [0], [0], [1], [0, 0, 1, 1], [], []>} : vector<16x128xbf16>, vector<128x128xbf16>, vector<16x128xf32> -> vector<16x128xf32>
    %c2_18 = arith.constant 2 : index
    %c0_19 = arith.constant 0 : index
    %c0_20 = arith.constant 0 : index
    %24 = vector.load %arg3[%c2_18, %c0_19, %c0_20] : memref<3x1x128xf32, #tpu.memory_space<vmem>>, vector<1x1x128xf32>
    %25 = vector.shape_cast %24 : vector<1x1x128xf32> to vector<1x128xf32>
    %26 = vector.broadcast %25 : vector<1x128xf32> to vector<16x128xf32>
    %27 = arith.addf %23, %26 : vector<16x128xf32>
    %28 = arith.truncf %27 : vector<16x128xf32> to vector<16x128xbf16>
    %c0_21 = arith.constant 0 : index
    %c0_22 = arith.constant 0 : index
    %29 = vector.load %arg4[%c0_21, %c0_22] : memref<16x128xbf16, #tpu.memory_space<vmem>>, vector<16x128xbf16>
    tpu.vector_store %arg4[%c0_21, %c0_22], %28 {strides = array<i32>} : memref<16x128xbf16, #tpu.memory_space<vmem>>, vector<16x128xbf16>,
    return
  }
  func.func @transform_0(%arg0: i32) -> (i32, i32) {
    %c0_i32 = arith.constant 0 : i32
    %c0_i32_0 = arith.constant 0 : i32
    return %arg0, %c0_i32 : i32, i32
  }
  func.func @transform_1(%arg0: i32) -> (i32, i32, i32) {
    %c0_i32 = arith.constant 0 : i32
    %c0_i32_0 = arith.constant 0 : i32
    %c0_i32_1 = arith.constant 0 : i32
    %c0_i32_2 = arith.constant 0 : i32
    return %c0_i32, %c0_i32_0, %c0_i32_1 : i32, i32, i32
  }
  func.func @transform_2(%arg0: i32) -> (i32, i32, i32) {
    %c0_i32 = arith.constant 0 : i32
    %c0_i32_0 = arith.constant 0 : i32
    %c0_i32_1 = arith.constant 0 : i32
    %c0_i32_2 = arith.constant 0 : i32
    return %c0_i32, %c0_i32_0, %c0_i32_1 : i32, i32, i32
  }
  func.func @transform_3(%arg0: i32) -> (i32, i32) {
    %c0_i32 = arith.constant 0 : i32
    %c0_i32_0 = arith.constant 0 : i32
    return %arg0, %c0_i32 : i32, i32
  }
}

</mosaic_0001>

<llo_original>
// kernel: mlp_forward.1
$region0: #{mlp_forward.1}
  #allocation0 [shape = 'u32[]', space=smem, size = 0x4, offset = 0x4, fixed_abs, tag = 'smem constant byte address 0x4 - core index']
  #allocation1 [shape = 'u32[144,128]{1,0:T(1,128)}', space=vmem, size = 0x12000, scoped, tag = 'internal scratch']
  %s0 = inlined_call_operand.vmem [shape: bf16[16,128], index: 0, kind: input, shape index: {}]
  %s1 = inlined_call_operand.hbm [shape: bf16[3,128,128], index: 1, kind: input, shape index: {}]
  %s2 = inlined_call_operand.vmem [shape: f32[3,1,128], index: 2, kind: input, shape index: {}]
  %s3 = inlined_call_operand.vmem [shape: bf16[16,128], index: 3, kind: output, shape index: {}]
  %s4 = sld [smem:[#allocation0]]
  $region26: #{mlp_forward.1} parent=0
    _
  %s6 = ssub.s32 1, %s4
  %s7 = scalar_select 0, %s6, %s4
  $region1: #{mlp_forward.1} parent=0
    #allocation2 [shape = 'u8[98304]{0}', space=vmem, size = 0x18000, scoped, tag = 'input window, operand 1, single buffered']
    #allocation3 [shape = 's32[1]{0}', space=sflag, size = 0x4, scoped, tag = 'scoped memory for mlp_forward.1']
    %8 = vsyncpa [#allocation3], 0
    // Predicated region
    $region2: #{mlp_forward.1} parent=1 // pred_check
      _
    $region3: #{mlp_forward.1} parent=1 // pred_check_branch
      %10 = sbr.rel (0) target = $region5
    $region4: #{mlp_forward.1} parent=1 // pred_region
      _
    $region5: #{mlp_forward.1} parent=1 // pred_fallthru
      _
    // Predicated region
    $region6: #{mlp_forward.1} parent=1 // pred_check
      _
    $region7: #{mlp_forward.1} parent=1 // pred_check_branch
      %12 = sbr.rel (0) target = $region9
    $region8: #{mlp_forward.1} parent=1 // pred_region
      %s14 = ssub.s32 3072, 3072
      %15 = vsyncadd [#allocation3], %s14
      %s16 = sshll.u32 [#allocation2], 4
      %s17 = int_to_ptr.vmem [resolvable:$true] %s16
      %22 = dma.hbm_to_vmem [thread:$0]  %s1, 3072, %s17, [#allocation3], 64, 64, 4
    $region9: #{mlp_forward.1} parent=1 // pred_fallthru
      _
    // Predicated region
    $region10: #{mlp_forward.1} parent=1 // pred_check
      _
    $region11: #{mlp_forward.1} parent=1 // pred_check_branch
      %24 = sbr.rel (0) target = $region13
    $region12: #{mlp_forward.1} parent=1 // pred_region
      _
    $region13: #{mlp_forward.1} parent=1 // pred_fallthru
      _
    // Predicated region
    $region14: #{mlp_forward.1} parent=1 // pred_check
      _
    $region15: #{mlp_forward.1} parent=1 // pred_check_branch
      %26 = sbr.rel (0) target = $region17
    $region16: #{mlp_forward.1} parent=1 // pred_region
      %27 = dma.done [#allocation3], 3072
    $region17: #{mlp_forward.1} parent=1 // pred_fallthru
      _
    %v29 = vld [vmem:[%s0] sm:$0xf]
    %v30 = vld [vmem:[%s0 + $0x4] sm:$0xf]
    %v31 = vld [vmem:[#allocation2] sm:$0xf]
    %v32 = vld [vmem:[#allocation2 + $0x4] sm:$0xf]
    %v33 = vld [vmem:[#allocation2 + $0x8] sm:$0xf]
    %v34 = vld [vmem:[#allocation2 + $0xc] sm:$0xf]
    %v35 = vld [vmem:[#allocation2 + $0x10] sm:$0xf]
    %v36 = vld [vmem:[#allocation2 + $0x14] sm:$0xf]
    %v37 = vld [vmem:[#allocation2 + $0x18] sm:$0xf]
    %v38 = vld [vmem:[#allocation2 + $0x1c] sm:$0xf]
    %v39 = vld [vmem:[#allocation2 + $0x20] sm:$0xf]
    %v40 = vld [vmem:[#allocation2 + $0x24] sm:$0xf]
    %v41 = vld [vmem:[#allocation2 + $0x28] sm:$0xf]
    %v42 = vld [vmem:[#allocation2 + $0x2c] sm:$0xf]
    %v43 = vld [vmem:[#allocation2 + $0x30] sm:$0xf]
    %v44 = vld [vmem:[#allocation2 + $0x34] sm:$0xf]
    %v45 = vld [vmem:[#allocation2 + $0x38] sm:$0xf]
    %v46 = vld [vmem:[#allocation2 + $0x3c] sm:$0xf]
    %v47 = vld [vmem:[%s2] sm:$0x1]
    %v49 = vlaneseq
    %v50 = vshrl.u32 %v49, 7
    %v51 = vsub.s32 0, %v50
    %v52 = vrot.slane %v47, %v51
    %v56 = vunpack.c.l.b16 %v29
    %v57 = vunpack.c.l.b16 %v30
    %v58 = vpack.c.b16 %v57, %v56
    %v76 = vunpack.c.l.b16 %v31
    %v77 = vunpack.c.l.b16 %v32
    %v78 = vunpack.c.l.b16 %v33
    %v79 = vunpack.c.l.b16 %v34
    %v80 = vunpack.c.l.b16 %v35
    %v81 = vunpack.c.l.b16 %v36
    %v82 = vunpack.c.l.b16 %v37
    %v83 = vunpack.c.l.b16 %v38
    %v84 = vunpack.c.l.b16 %v39
    %v85 = vunpack.c.l.b16 %v40
    %v86 = vunpack.c.l.b16 %v41
    %v87 = vunpack.c.l.b16 %v42
    %v88 = vunpack.c.l.b16 %v43
    %v89 = vunpack.c.l.b16 %v44
    %v90 = vunpack.c.l.b16 %v45
    %v91 = vunpack.c.l.b16 %v46
    %v92 = vpack.c.b16 %v77, %v76
    %v93 = vpack.c.b16 %v79, %v78
    %v94 = vpack.c.b16 %v81, %v80
    %v95 = vpack.c.b16 %v83, %v82
    %v96 = vpack.c.b16 %v85, %v84
    %v97 = vpack.c.b16 %v87, %v86
    %v98 = vpack.c.b16 %v89, %v88
    %v99 = vpack.c.b16 %v91, %v90
    %108 = vmatprep.subr.bf16.mxu0 0
    %109 = vmatpush1.bf16.msra.mxu0 %v92
    %110 = vmatprep.subr.bf16.mxu0 0
    %111 = vmatpush1.bf16.msra.mxu0 %v93
    %112 = vmatprep.subr.bf16.mxu0 0
    %113 = vmatpush1.bf16.msra.mxu0 %v94
    %114 = vmatprep.subr.bf16.mxu0 0
    %115 = vmatpush1.bf16.msra.mxu0 %v95
    %116 = vmatprep.subr.bf16.mxu0 0
    %117 = vmatpush1.bf16.msra.mxu0 %v96
    %118 = vmatprep.subr.bf16.mxu0 0
    %119 = vmatpush1.bf16.msra.mxu0 %v97
    %120 = vmatprep.subr.bf16.mxu0 0
    %121 = vmatpush1.bf16.msra.mxu0 %v98
    %122 = vmatprep.subr.bf16.mxu0 0
    %123 = vmatpush1.bf16.msra.mxu0 %v99
    %124 = vmatprep.subr.bf16.mxu0 0
    %125 = vmatpush1.bf16.msra.mxu0 0
    %126 = vmatprep.subr.bf16.mxu0 0
    %127 = vmatpush1.bf16.msra.mxu0 0
    %128 = vmatprep.subr.bf16.mxu0 0
    %129 = vmatpush1.bf16.msra.mxu0 0
    %130 = vmatprep.subr.bf16.mxu0 0
    %131 = vmatpush1.bf16.msra.mxu0 0
    %132 = vmatprep.subr.bf16.mxu0 0
    %133 = vmatpush1.bf16.msra.mxu0 0
    %134 = vmatprep.subr.bf16.mxu0 0
    %135 = vmatpush1.bf16.msra.mxu0 0
    %136 = vmatprep.subr.bf16.mxu0 0
    %137 = vmatpush1.bf16.msra.mxu0 0
    %138 = vmatprep.subr.bf16.mxu0 0
    %139 = vmatpush1.bf16.msra.mxu0 0
    %140 = vmatprep.mubr.bf16.mxu0 0
    %141 = vmatmul.mubr.bf16.gmra.mrb[0].mxu0 %v58
    %v142 = vpop.f32.mrb[0].mxu0
    %v143 = vadd.f32 %v52, %v142
    %v144 = vpop.f32.mrb[0].mxu0
    %v145 = vpop.f32.mrb[0].mxu0
    %v146 = vadd.f32 %v52, %v145
    %v147 = vpop.f32.mrb[0].mxu0
    %148 = vdwg.mxu0
    %v149 = vmax.f32 %v143, 0.0
    %v150 = vmax.f32 %v146, 0.0
    %v151 = vpack.c.bf16 %v150, %v149
    %s152 = scalar_lea.vmem [#allocation2], 64
    %v153 = vld [vmem:[%s152] sm:$0xf]
    %v154 = vld [vmem:[%s152 + $0x4] sm:$0xf]
    %v155 = vld [vmem:[%s152 + $0x8] sm:$0xf]
    %v156 = vld [vmem:[%s152 + $0xc] sm:$0xf]
    %v157 = vld [vmem:[%s152 + $0x10] sm:$0xf]
    %v158 = vld [vmem:[%s152 + $0x14] sm:$0xf]
    %v159 = vld [vmem:[%s152 + $0x18] sm:$0xf]
    %v160 = vld [vmem:[%s152 + $0x1c] sm:$0xf]
    %v161 = vld [vmem:[%s152 + $0x20] sm:$0xf]
    %v162 = vld [vmem:[%s152 + $0x24] sm:$0xf]
    %v163 = vld [vmem:[%s152 + $0x28] sm:$0xf]
    %v164 = vld [vmem:[%s152 + $0x2c] sm:$0xf]
    %v165 = vld [vmem:[%s152 + $0x30] sm:$0xf]
    %v166 = vld [vmem:[%s152 + $0x34] sm:$0xf]
    %v167 = vld [vmem:[%s152 + $0x38] sm:$0xf]
    %v168 = vld [vmem:[%s152 + $0x3c] sm:$0xf]
    %s169 = scalar_lea.vmem %s2, 1
    %v170 = vld [vmem:[%s169] sm:$0x1]
    %v172 = vlaneseq
    %v173 = vshrl.u32 %v172, 7
    %v174 = vsub.s32 0, %v173
    %v175 = vrot.slane %v170, %v174
    %v193 = vunpack.c.l.b16 %v153
    %v194 = vunpack.c.l.b16 %v154
    %v195 = vunpack.c.l.b16 %v155
    %v196 = vunpack.c.l.b16 %v156
    %v197 = vunpack.c.l.b16 %v157
    %v198 = vunpack.c.l.b16 %v158
    %v199 = vunpack.c.l.b16 %v159
    %v200 = vunpack.c.l.b16 %v160
    %v201 = vunpack.c.l.b16 %v161
    %v202 = vunpack.c.l.b16 %v162
    %v203 = vunpack.c.l.b16 %v163
    %v204 = vunpack.c.l.b16 %v164
    %v205 = vunpack.c.l.b16 %v165
    %v206 = vunpack.c.l.b16 %v166
    %v207 = vunpack.c.l.b16 %v167
    %v208 = vunpack.c.l.b16 %v168
    %v209 = vpack.c.b16 %v194, %v193
    %v210 = vpack.c.b16 %v196, %v195
    %v211 = vpack.c.b16 %v198, %v197
    %v212 = vpack.c.b16 %v200, %v199
    %v213 = vpack.c.b16 %v202, %v201
    %v214 = vpack.c.b16 %v204, %v203
    %v215 = vpack.c.b16 %v206, %v205
    %v216 = vpack.c.b16 %v208, %v207
    %225 = vmatprep.subr.bf16.mxu0 0
    %226 = vmatpush1.bf16.msra.mxu0 %v209
    %227 = vmatprep.subr.bf16.mxu0 0
    %228 = vmatpush1.bf16.msra.mxu0 %v210
    %229 = vmatprep.subr.bf16.mxu0 0
    %230 = vmatpush1.bf16.msra.mxu0 %v211
    %231 = vmatprep.subr.bf16.mxu0 0
    %232 = vmatpush1.bf16.msra.mxu0 %v212
    %233 = vmatprep.subr.bf16.mxu0 0
    %234 = vmatpush1.bf16.msra.mxu0 %v213
    %235 = vmatprep.subr.bf16.mxu0 0
    %236 = vmatpush1.bf16.msra.mxu0 %v214
    %237 = vmatprep.subr.bf16.mxu0 0
    %238 = vmatpush1.bf16.msra.mxu0 %v215
    %239 = vmatprep.subr.bf16.mxu0 0
    %240 = vmatpush1.bf16.msra.mxu0 %v216
    %241 = vmatprep.subr.bf16.mxu0 0
    %242 = vmatpush1.bf16.msra.mxu0 0
    %243 = vmatprep.subr.bf16.mxu0 0
    %244 = vmatpush1.bf16.msra.mxu0 0
    %245 = vmatprep.subr.bf16.mxu0 0
    %246 = vmatpush1.bf16.msra.mxu0 0
    %247 = vmatprep.subr.bf16.mxu0 0
    %248 = vmatpush1.bf16.msra.mxu0 0
    %249 = vmatprep.subr.bf16.mxu0 0
    %250 = vmatpush1.bf16.msra.mxu0 0
    %251 = vmatprep.subr.bf16.mxu0 0
    %252 = vmatpush1.bf16.msra.mxu0 0
    %253 = vmatprep.subr.bf16.mxu0 0
    %254 = vmatpush1.bf16.msra.mxu0 0
    %255 = vmatprep.subr.bf16.mxu0 0
    %256 = vmatpush1.bf16.msra.mxu0 0
    %257 = vmatprep.mubr.bf16.mxu0 0
    %258 = vmatmul.mubr.bf16.gmra.mrb[0].mxu0 %v151
    %v259 = vpop.f32.mrb[0].mxu0
    %v260 = vadd.f32 %v175, %v259
    %v261 = vpop.f32.mrb[0].mxu0
    %v262 = vpop.f32.mrb[0].mxu0
    %v263 = vadd.f32 %v175, %v262
    %v264 = vpop.f32.mrb[0].mxu0
    %265 = vdwg.mxu0
    %v266 = vmax.f32 %v260, 0.0
    %v267 = vmax.f32 %v263, 0.0
    %v268 = vpack.c.bf16 %v267, %v266
    %s269 = scalar_lea.vmem [#allocation2], 128
    %v270 = vld [vmem:[%s269] sm:$0xf]
    %v271 = vld [vmem:[%s269 + $0x4] sm:$0xf]
    %v272 = vld [vmem:[%s269 + $0x8] sm:$0xf]
    %v273 = vld [vmem:[%s269 + $0xc] sm:$0xf]
    %v274 = vld [vmem:[%s269 + $0x10] sm:$0xf]
    %v275 = vld [vmem:[%s269 + $0x14] sm:$0xf]
    %v276 = vld [vmem:[%s269 + $0x18] sm:$0xf]
    %v277 = vld [vmem:[%s269 + $0x1c] sm:$0xf]
    %v278 = vld [vmem:[%s269 + $0x20] sm:$0xf]
    %v279 = vld [vmem:[%s269 + $0x24] sm:$0xf]
    %v280 = vld [vmem:[%s269 + $0x28] sm:$0xf]
    %v281 = vld [vmem:[%s269 + $0x2c] sm:$0xf]
    %v282 = vld [vmem:[%s269 + $0x30] sm:$0xf]
    %v283 = vld [vmem:[%s269 + $0x34] sm:$0xf]
    %v284 = vld [vmem:[%s269 + $0x38] sm:$0xf]
    %v285 = vld [vmem:[%s269 + $0x3c] sm:$0xf]
    %s286 = scalar_lea.vmem %s2, 2
    %v287 = vld [vmem:[%s286] sm:$0x1]
    %v289 = vlaneseq
    %v290 = vshrl.u32 %v289, 7
    %v291 = vsub.s32 0, %v290
    %v292 = vrot.slane %v287, %v291
    %v310 = vunpack.c.l.b16 %v270
    %v311 = vunpack.c.l.b16 %v271
    %v312 = vunpack.c.l.b16 %v272
    %v313 = vunpack.c.l.b16 %v273
    %v314 = vunpack.c.l.b16 %v274
    %v315 = vunpack.c.l.b16 %v275
    %v316 = vunpack.c.l.b16 %v276
    %v317 = vunpack.c.l.b16 %v277
    %v318 = vunpack.c.l.b16 %v278
    %v319 = vunpack.c.l.b16 %v279
    %v320 = vunpack.c.l.b16 %v280
    %v321 = vunpack.c.l.b16 %v281
    %v322 = vunpack.c.l.b16 %v282
    %v323 = vunpack.c.l.b16 %v283
    %v324 = vunpack.c.l.b16 %v284
    %v325 = vunpack.c.l.b16 %v285
    %v326 = vpack.c.b16 %v311, %v310
    %v327 = vpack.c.b16 %v313, %v312
    %v328 = vpack.c.b16 %v315, %v314
    %v329 = vpack.c.b16 %v317, %v316
    %v330 = vpack.c.b16 %v319, %v318
    %v331 = vpack.c.b16 %v321, %v320
    %v332 = vpack.c.b16 %v323, %v322
    %v333 = vpack.c.b16 %v325, %v324
    %342 = vmatprep.subr.bf16.mxu0 0
    %343 = vmatpush1.bf16.msra.mxu0 %v326
    %344 = vmatprep.subr.bf16.mxu0 0
    %345 = vmatpush1.bf16.msra.mxu0 %v327
    %346 = vmatprep.subr.bf16.mxu0 0
    %347 = vmatpush1.bf16.msra.mxu0 %v328
    %348 = vmatprep.subr.bf16.mxu0 0
    %349 = vmatpush1.bf16.msra.mxu0 %v329
    %350 = vmatprep.subr.bf16.mxu0 0
    %351 = vmatpush1.bf16.msra.mxu0 %v330
    %352 = vmatprep.subr.bf16.mxu0 0
    %353 = vmatpush1.bf16.msra.mxu0 %v331
    %354 = vmatprep.subr.bf16.mxu0 0
    %355 = vmatpush1.bf16.msra.mxu0 %v332
    %356 = vmatprep.subr.bf16.mxu0 0
    %357 = vmatpush1.bf16.msra.mxu0 %v333
    %358 = vmatprep.subr.bf16.mxu0 0
    %359 = vmatpush1.bf16.msra.mxu0 0
    %360 = vmatprep.subr.bf16.mxu0 0
    %361 = vmatpush1.bf16.msra.mxu0 0
    %362 = vmatprep.subr.bf16.mxu0 0
    %363 = vmatpush1.bf16.msra.mxu0 0
    %364 = vmatprep.subr.bf16.mxu0 0
    %365 = vmatpush1.bf16.msra.mxu0 0
    %366 = vmatprep.subr.bf16.mxu0 0
    %367 = vmatpush1.bf16.msra.mxu0 0
    %368 = vmatprep.subr.bf16.mxu0 0
    %369 = vmatpush1.bf16.msra.mxu0 0
    %370 = vmatprep.subr.bf16.mxu0 0
    %371 = vmatpush1.bf16.msra.mxu0 0
    %372 = vmatprep.subr.bf16.mxu0 0
    %373 = vmatpush1.bf16.msra.mxu0 0
    %374 = vmatprep.mubr.bf16.mxu0 0
    %375 = vmatmul.mubr.bf16.gmra.mrb[0].mxu0 %v268
    %v376 = vpop.f32.mrb[0].mxu0
    %v377 = vadd.f32 %v292, %v376
    %v378 = vpop.f32.mrb[0].mxu0
    %v379 = vpop.f32.mrb[0].mxu0
    %v380 = vadd.f32 %v292, %v379
    %v381 = vpop.f32.mrb[0].mxu0
    %382 = vdwg.mxu0
    %v383 = vpack.c.bf16 %v380, %v377
    %v385 = vunpack.c.l.b16 %v383
    %v386 = vunpack.c.h.b16 %v383
    %v387 = vpack.c.b16 %v385, %v385
    %v388 = vpack.c.b16 %v386, %v386
    %391 = vst [vmem:[%s3] sm:$0xf] %v387
    %392 = vst [vmem:[%s3 + $0x4] sm:$0xf] %v388
    // Predicated region
    $region18: #{mlp_forward.1} parent=1 // pred_check
      _
    $region19: #{mlp_forward.1} parent=1 // pred_check_branch
      %394 = sbr.rel (0) target = $region21
    $region20: #{mlp_forward.1} parent=1 // pred_region
      _
    $region21: #{mlp_forward.1} parent=1 // pred_fallthru
      _
    // Predicated region
    $region22: #{mlp_forward.1} parent=1 // pred_check
      _
    $region23: #{mlp_forward.1} parent=1 // pred_check_branch
      %396 = sbr.rel (0) target = $region25
    $region24: #{mlp_forward.1} parent=1 // pred_region
      _
    $region25: #{mlp_forward.1} parent=1 // pred_fallthru
      _
    %397 = vsyncpa [#allocation3], 1

</llo_original>
